<compile_context>
chip_gen: v6e
topology: v6e:2x2x1
jax: 0.10.0
libtpu: 0.0.40
codegen_flags: <defaults>
</compile_context>

<pallas_src>
import jax
import jax.numpy as jnp
from jax.experimental import pallas as pl
from jax.experimental.pallas import tpu as pltpu

# BCEFocalLoss defaults
ALPHA = 0.25
GAMMA = 2.0          # exploited as an explicit square below
EPS = 1e-4
# BCEFocal2WayLoss weights=[1, 1]
W0, W1 = 1.0, 1.0

_PAD_NEG = -1e30     # padding logit value: with target 0 it contributes exactly 0 loss


def _round_up(x, m):
    return (x + m - 1) // m * m


def _focal_sum(x, t):
    """Sum of element-wise focal BCE-with-logits loss (f32), specialized to gamma == 2."""
    ax = jnp.abs(x)
    e = jnp.exp(-ax)                              # single EUP exp per element
    bce = jnp.maximum(x, 0.0) - x * t + jnp.log1p(e)
    r = 1.0 / (1.0 + e)                           # exact reciprocal (keeps 1e-5 tolerance)
    p = jnp.where(x >= 0.0, r, e * r)             # sigmoid(x), reusing e (no second exp)
    p = jnp.clip(p, EPS, 1.0 - EPS)
    q = 1.0 - p
    loss = (t * ALPHA) * (q * q) * bce + (1.0 - t) * (p * p) * bce
    return jnp.sum(loss)


def _focal2way_kernel(clip_ref, tgt_ref, frame_ref, out_ref, fmax_ref):
    # grid = (lane_blocks, T_tiles); T is the reduction (running-max) axis.
    k = pl.program_id(1)

    @pl.when(k == 0)
    def _init():
        fmax_ref[...] = jnp.full(fmax_ref.shape, -jnp.inf, jnp.float32)

    # Running max over the streamed T tiles (sublane reduce; no EUP work here).
    fmax_ref[...] = jnp.maximum(
        fmax_ref[...], jnp.max(frame_ref[...], axis=0, keepdims=True)
    )

    @pl.when(k == pl.num_programs(1) - 1)
    def _finalize():
        t = tgt_ref[...]
        partial = (W0 * _focal_sum(clip_ref[...], t)
                   + W1 * _focal_sum(fmax_ref[...], t))
        # Broadcast the per-lane-block partial into this block's 128 output lanes
        # (keeps the store unmasked / lane-dense; wrapper reads lane 0 of each block).
        out_ref[...] = jnp.full(out_ref.shape, partial, dtype=jnp.float32)


def bce_focal_2way_loss(logit, frame_logit, target, *, t_tile=None, lane_blocks=2):
    B, C = logit.shape
    Bf, T, Cf = frame_logit.shape
    assert (Bf, Cf) == (B, C) and target.shape == (B, C)

    N = B * C
    n_blk = max(1, min(int(lane_blocks), pl.cdiv(N, 128)))
    Npad = _round_up(N, 128 * n_blk)
    L = Npad // n_blk

    # Frame tile over T: ~4 MiB per block (double-buffered => ~8 MiB, safe on v7x VMEM).
    if t_tile is None:
        block_bytes = 4 * 1024 * 1024
        t_tile = max(8, (block_bytes // (L * 4)) // 8 * 8)
    t_tile = int(min(_round_up(T, 8), _round_up(int(t_tile), 8)))
    Tpad = _round_up(T, t_tile)
    n_t = Tpad // t_tile

    f32 = jnp.float32
    clip = jnp.pad(logit.astype(f32).reshape(1, N),
                   ((0, 0), (0, Npad - N)), constant_values=_PAD_NEG)
    tgt = jnp.pad(target.astype(f32).reshape(1, N),
                  ((0, 0), (0, Npad - N)), constant_values=0.0)
    frame = jnp.transpose(frame_logit.astype(f32), (1, 0, 2)).reshape(T, N)
    frame = jnp.pad(frame, ((0, Tpad - T), (0, Npad - N)), constant_values=_PAD_NEG)

    cost = pl.CostEstimate(
        flops=int(Tpad * Npad + 40 * Npad),
        transcendentals=int(4 * Npad),                 # exp + log1p per focal element
        bytes_accessed=int(4 * (Tpad * Npad + 2 * Npad + n_blk * 128)),
    )

    partials = pl.pallas_call(
        _focal2way_kernel,
        out_shape=jax.ShapeDtypeStruct((1, n_blk * 128), f32),
        grid_spec=pltpu.PrefetchScalarGridSpec(
            num_scalar_prefetch=0,
            grid=(n_blk, n_t),
            in_specs=[
                pl.BlockSpec((1, L), lambda i, k: (0, i)),        # clip logits
                pl.BlockSpec((1, L), lambda i, k: (0, i)),        # targets
                pl.BlockSpec((t_tile, L), lambda i, k: (k, i)),   # frame logits (streamed)
            ],
            out_specs=pl.BlockSpec((1, 128), lambda i, k: (0, i)),
            scratch_shapes=[pltpu.VMEM((1, L), f32)],             # running max over T
        ),
        compiler_params=pltpu.CompilerParams(
            dimension_semantics=("parallel", "arbitrary"),
            vmem_limit_bytes=32 * 1024 * 1024,
        ),
        cost_estimate=cost,
    )(clip, tgt, frame)

    # One (broadcast) partial per lane block; final combine + mean in the wrapper.
    per_block = partials.reshape(n_blk, 128)[:, 0]
    return jnp.sum(per_block) / N


def _reference(logit, frame_logit, target):
    """Pure-JAX reference mirroring the PyTorch module."""
    def focal(x, t):
        bce = jnp.maximum(x, 0.0) - x * t + jnp.log1p(jnp.exp(-jnp.abs(x)))
        p = jnp.clip(jax.nn.sigmoid(x), EPS, 1.0 - EPS)
        loss = t * ALPHA * (1.0 - p) ** GAMMA * bce + (1.0 - t) * p ** GAMMA * bce
        return jnp.mean(loss)
    fmax = jnp.max(frame_logit, axis=1)
    return W0 * focal(logit, target) + W1 * focal(fmax, target)


if __name__ == "__main__":
    # Small but non-trivial shapes: N = B*C = 160 > 128 (2 lane blocks exercise the
    # "parallel" axis) and T = 30 with t_tile=8 (4 streamed T tiles + T padding).
    B, T, C = 4, 30, 40

    key = jax.random.PRNGKey(0)
    k1, k2, k3 = jax.random.split(key, 3)
    logit = jax.random.normal(k1, (B, C), dtype=jnp.float32)
    frame_logit = jax.random.normal(k2, (B, T, C), dtype=jnp.float32)
    target = (jax.random.uniform(k3, (B, C)) > 0.5).astype(jnp.float32)

    out = bce_focal_2way_loss(logit, frame_logit, target, t_tile=8)
    out = jax.block_until_ready(out)

    ref = _reference(logit, frame_logit, target)
    assert jnp.allclose(out, ref, rtol=1e-5, atol=1e-5), (out, ref)

    print("KERNEL_OK")
</pallas_src>

<mosaic_0001>
module attributes {stable_mosaic.version = 11 : i64} {
  func.func @_focal2way_kernel(%arg0: i32, %arg1: i32, %arg2: memref<1x128xf32, #tpu.memory_space<vmem>>, %arg3: memref<1x128xf32, #tpu.memory_space<vmem>>, %arg4: memref<8x128xf32, #tpu.memory_space<vmem>>, %arg5: memref<1x128xf32, #tpu.memory_space<vmem>>, %arg6: memref<1x128xf32, #tpu.memory_space<vmem>>) attributes {dimension_semantics = [#tpu.dimension_semantics<parallel>, #tpu.dimension_semantics<arbitrary>], iteration_bounds = array<i64: 2, 4>, scalar_prefetch = 0 : i64, scratch_operands = 1 : i64, tpu.core_type = #tpu.core_type<tc>, window_params = [{transform_indices = @transform_0, window_bounds = array<i64: 1, 128>}, {transform_indices = @transform_1, window_bounds = array<i64: 1, 128>}, {transform_indices = @transform_2, window_bounds = array<i64: 8, 128>}, {transform_indices = @transform_3, window_bounds = array<i64: 1, 128>}]} {
    %c0_i32 = arith.constant 0 : i32
    %0 = arith.cmpi eq, %arg1, %c0_i32 : i32
    %1 = arith.extui %0 : i1 to i32
    %c0_i32_0 = arith.constant 0 : i32
    %2 = arith.cmpi ne, %1, %c0_i32_0 : i32
    scf.if %2 {
      %cst_7 = arith.constant 0xFF800000 : f32
      %12 = vector.broadcast %cst_7 : f32 to vector<1x128xf32>
      %c0_8 = arith.constant 0 : index
      %c0_9 = arith.constant 0 : index
      %13 = vector.load %arg6[%c0_8, %c0_9] : memref<1x128xf32, #tpu.memory_space<vmem>>, vector<1x128xf32>
      tpu.vector_store %arg6[%c0_8, %c0_9], %12 {strides = array<i32>} : memref<1x128xf32, #tpu.memory_space<vmem>>, vector<1x128xf32>,
    } else {
    }
    %c0 = arith.constant 0 : index
    %c0_1 = arith.constant 0 : index
    %3 = vector.load %arg6[%c0, %c0_1] : memref<1x128xf32, #tpu.memory_space<vmem>>, vector<1x128xf32>
    %c0_2 = arith.constant 0 : index
    %c0_3 = arith.constant 0 : index
    %4 = vector.load %arg4[%c0_2, %c0_3] : memref<8x128xf32, #tpu.memory_space<vmem>>, vector<8x128xf32>
    %cst = arith.constant dense<0xFF800000> : vector<128xf32>
    %5 = vector.multi_reduction <maximumf>, %4, %cst [0] : vector<8x128xf32> to vector<128xf32>
    %6 = vector.shape_cast %5 : vector<128xf32> to vector<1x128xf32>
    %7 = arith.maximumf %3, %6 : vector<1x128xf32>
    %c0_4 = arith.constant 0 : index
    %c0_5 = arith.constant 0 : index
    %8 = vector.load %arg6[%c0_4, %c0_5] : memref<1x128xf32, #tpu.memory_space<vmem>>, vector<1x128xf32>
    tpu.vector_store %arg6[%c0_4, %c0_5], %7 {strides = array<i32>} : memref<1x128xf32, #tpu.memory_space<vmem>>, vector<1x128xf32>,
    %c3_i32 = arith.constant 3 : i32
    %9 = arith.cmpi eq, %arg1, %c3_i32 : i32
    %10 = arith.extui %9 : i1 to i32
    %c0_i32_6 = arith.constant 0 : i32
    %11 = arith.cmpi ne, %10, %c0_i32_6 : i32
    scf.if %11 {
      %c0_7 = arith.constant 0 : index
      %c0_8 = arith.constant 0 : index
      %12 = vector.load %arg3[%c0_7, %c0_8] : memref<1x128xf32, #tpu.memory_space<vmem>>, vector<1x128xf32>
      %c0_9 = arith.constant 0 : index
      %c0_10 = arith.constant 0 : index
      %13 = vector.load %arg2[%c0_9, %c0_10] : memref<1x128xf32, #tpu.memory_space<vmem>>, vector<1x128xf32>
      %14 = math.absf %13 : vector<1x128xf32>
      %cst_11 = arith.constant 0.000000e+00 : f32
      %15 = vector.broadcast %cst_11 : f32 to vector<1x128xf32>
      %16 = arith.subf %15, %14 : vector<1x128xf32>
      %17 = math.exp %16 : vector<1x128xf32>
      %cst_12 = arith.constant 0.000000e+00 : f32
      %18 = vector.broadcast %cst_12 : f32 to vector<1x128xf32>
      %19 = arith.maximumf %13, %18 : vector<1x128xf32>
      %20 = arith.mulf %13, %12 : vector<1x128xf32>
      %21 = arith.subf %19, %20 : vector<1x128xf32>
      %22 = math.log1p %17 : vector<1x128xf32>
      %23 = arith.addf %21, %22 : vector<1x128xf32>
      %cst_13 = arith.constant 1.000000e+00 : f32
      %24 = vector.broadcast %cst_13 : f32 to vector<1x128xf32>
      %25 = arith.addf %24, %17 : vector<1x128xf32>
      %cst_14 = arith.constant 1.000000e+00 : f32
      %26 = vector.broadcast %cst_14 : f32 to vector<1x128xf32>
      %27 = arith.divf %26, %25 : vector<1x128xf32>
      %cst_15 = arith.constant 0.000000e+00 : f32
      %28 = vector.broadcast %cst_15 : f32 to vector<1x128xf32>
      %29 = arith.cmpf oge, %13, %28 : vector<1x128xf32>
      %30 = arith.mulf %17, %27 : vector<1x128xf32>
      %31 = arith.select %29, %27, %30 : vector<1x128xi1>, vector<1x128xf32>
      %cst_16 = arith.constant 9.99999974E-5 : f32
      %cst_17 = arith.constant 0.999899983 : f32
      %32 = vector.broadcast %cst_16 : f32 to vector<1x128xf32>
      %33 = arith.maximumf %32, %31 : vector<1x128xf32>
      %34 = vector.broadcast %cst_17 : f32 to vector<1x128xf32>
      %35 = arith.minimumf %34, %33 : vector<1x128xf32>
      %cst_18 = arith.constant 1.000000e+00 : f32
      %36 = vector.broadcast %cst_18 : f32 to vector<1x128xf32>
      %37 = arith.subf %36, %35 : vector<1x128xf32>
      %cst_19 = arith.constant 2.500000e-01 : f32
      %38 = vector.broadcast %cst_19 : f32 to vector<1x128xf32>
      %39 = arith.mulf %12, %38 : vector<1x128xf32>
      %40 = arith.mulf %37, %37 : vector<1x128xf32>
      %41 = arith.mulf %39, %40 : vector<1x128xf32>
      %42 = arith.mulf %41, %23 : vector<1x128xf32>
      %cst_20 = arith.constant 1.000000e+00 : f32
      %43 = vector.broadcast %cst_20 : f32 to vector<1x128xf32>
      %44 = arith.subf %43, %12 : vector<1x128xf32>
      %45 = arith.mulf %35, %35 : vector<1x128xf32>
      %46 = arith.mulf %44, %45 : vector<1x128xf32>
      %47 = arith.mulf %46, %23 : vector<1x128xf32>
      %48 = arith.addf %42, %47 : vector<1x128xf32>
      %49 = vector.shape_cast %48 : vector<1x128xf32> to vector<1x1x128xf32>
      %cst_21 = arith.constant dense<0.000000e+00> : vector<1xf32>
      %50 = vector.multi_reduction <add>, %49, %cst_21 [1, 2] : vector<1x1x128xf32> to vector<1xf32>
      %51 = vector.shape_cast %50 : vector<1xf32> to vector<1x1x1xf32>
      %52 = vector.extract %51[0, 0, 0] : f32 from vector<1x1x1xf32>
      %cst_22 = arith.constant 1.000000e+00 : f32
      %53 = arith.mulf %cst_22, %52 : f32
      %c0_23 = arith.constant 0 : index
      %c0_24 = arith.constant 0 : index
      %54 = vector.load %arg6[%c0_23, %c0_24] : memref<1x128xf32, #tpu.memory_space<vmem>>, vector<1x128xf32>
      %55 = math.absf %54 : vector<1x128xf32>
      %cst_25 = arith.constant 0.000000e+00 : f32
      %56 = vector.broadcast %cst_25 : f32 to vector<1x128xf32>
      %57 = arith.subf %56, %55 : vector<1x128xf32>
      %58 = math.exp %57 : vector<1x128xf32>
      %cst_26 = arith.constant 0.000000e+00 : f32
      %59 = vector.broadcast %cst_26 : f32 to vector<1x128xf32>
      %60 = arith.maximumf %54, %59 : vector<1x128xf32>
      %61 = arith.mulf %54, %12 : vector<1x128xf32>
      %62 = arith.subf %60, %61 : vector<1x128xf32>
      %63 = math.log1p %58 : vector<1x128xf32>
      %64 = arith.addf %62, %63 : vector<1x128xf32>
      %cst_27 = arith.constant 1.000000e+00 : f32
      %65 = vector.broadcast %cst_27 : f32 to vector<1x128xf32>
      %66 = arith.addf %65, %58 : vector<1x128xf32>
      %cst_28 = arith.constant 1.000000e+00 : f32
      %67 = vector.broadcast %cst_28 : f32 to vector<1x128xf32>
      %68 = arith.divf %67, %66 : vector<1x128xf32>
      %cst_29 = arith.constant 0.000000e+00 : f32
      %69 = vector.broadcast %cst_29 : f32 to vector<1x128xf32>
      %70 = arith.cmpf oge, %54, %69 : vector<1x128xf32>
      %71 = arith.mulf %58, %68 : vector<1x128xf32>
      %72 = arith.select %70, %68, %71 : vector<1x128xi1>, vector<1x128xf32>
      %cst_30 = arith.constant 9.99999974E-5 : f32
      %cst_31 = arith.constant 0.999899983 : f32
      %73 = vector.broadcast %cst_30 : f32 to vector<1x128xf32>
      %74 = arith.maximumf %73, %72 : vector<1x128xf32>
      %75 = vector.broadcast %cst_31 : f32 to vector<1x128xf32>
      %76 = arith.minimumf %75, %74 : vector<1x128xf32>
      %cst_32 = arith.constant 1.000000e+00 : f32
      %77 = vector.broadcast %cst_32 : f32 to vector<1x128xf32>
      %78 = arith.subf %77, %76 : vector<1x128xf32>
      %cst_33 = arith.constant 2.500000e-01 : f32
      %79 = vector.broadcast %cst_33 : f32 to vector<1x128xf32>
      %80 = arith.mulf %12, %79 : vector<1x128xf32>
      %81 = arith.mulf %78, %78 : vector<1x128xf32>
      %82 = arith.mulf %80, %81 : vector<1x128xf32>
      %83 = arith.mulf %82, %64 : vector<1x128xf32>
      %cst_34 = arith.constant 1.000000e+00 : f32
      %84 = vector.broadcast %cst_34 : f32 to vector<1x128xf32>
      %85 = arith.subf %84, %12 : vector<1x128xf32>
      %86 = arith.mulf %76, %76 : vector<1x128xf32>
      %87 = arith.mulf %85, %86 : vector<1x128xf32>
      %88 = arith.mulf %87, %64 : vector<1x128xf32>
      %89 = arith.addf %83, %88 : vector<1x128xf32>
      %90 = vector.shape_cast %89 : vector<1x128xf32> to vector<1x1x128xf32>
      %cst_35 = arith.constant dense<0.000000e+00> : vector<1xf32>
      %91 = vector.multi_reduction <add>, %90, %cst_35 [1, 2] : vector<1x1x128xf32> to vector<1xf32>
      %92 = vector.shape_cast %91 : vector<1xf32> to vector<1x1x1xf32>
      %93 = vector.extract %92[0, 0, 0] : f32 from vector<1x1x1xf32>
      %cst_36 = arith.constant 1.000000e+00 : f32
      %94 = arith.mulf %cst_36, %93 : f32
      %95 = arith.addf %53, %94 : f32
      %96 = vector.broadcast %95 : f32 to vector<1x128xf32>
      %c0_37 = arith.constant 0 : index
      %c0_38 = arith.constant 0 : index
      %97 = vector.load %arg5[%c0_37, %c0_38] : memref<1x128xf32, #tpu.memory_space<vmem>>, vector<1x128xf32>
      tpu.vector_store %arg5[%c0_37, %c0_38], %96 {strides = array<i32>} : memref<1x128xf32, #tpu.memory_space<vmem>>, vector<1x128xf32>,
    } else {
    }
    return
  }
  func.func @transform_0(%arg0: i32, %arg1: i32) -> (i32, i32) {
    %c0_i32 = arith.constant 0 : i32
    %c0_i32_0 = arith.constant 0 : i32
    return %c0_i32, %arg0 : i32, i32
  }
  func.func @transform_1(%arg0: i32, %arg1: i32) -> (i32, i32) {
    %c0_i32 = arith.constant 0 : i32
    %c0_i32_0 = arith.constant 0 : i32
    return %c0_i32, %arg0 : i32, i32
  }
  func.func @transform_2(%arg0: i32, %arg1: i32) -> (i32, i32) {
    %c0_i32 = arith.constant 0 : i32
    return %arg1, %arg0 : i32, i32
  }
  func.func @transform_3(%arg0: i32, %arg1: i32) -> (i32, i32) {
    %c0_i32 = arith.constant 0 : i32
    %c0_i32_0 = arith.constant 0 : i32
    return %c0_i32, %arg0 : i32, i32
  }
}

</mosaic_0001>

<llo_original>
// kernel: tpu_custom_call.1
$region0: #{tpu_custom_call.1}
  #allocation0 [shape = 'u32[]', space=smem, size = 0x4, offset = 0x4, fixed_abs, tag = 'smem constant byte address 0x4 - core index']
  #allocation1 [shape = 'u32[144,128]{1,0:T(1,128)}', space=vmem, size = 0x12000, scoped, tag = 'internal scratch']
  #allocation2 [shape = 'f32[1,128]{1,0:T(1,128)}', space=vmem, size = 0x200, scoped, tag = 'scratch operand']
  %s0 = inlined_call_operand.hbm [shape: f32[1,256], index: 0, kind: input, shape index: {}]
  %s1 = inlined_call_operand.hbm [shape: f32[1,256], index: 1, kind: input, shape index: {}]
  %s2 = inlined_call_operand.hbm [shape: f32[32,256], index: 2, kind: input, shape index: {}]
  %s3 = inlined_call_operand.hbm [shape: f32[1,256], index: 3, kind: output, shape index: {}]
  %s4 = sld [smem:[#allocation0]]
  $region65: #{tpu_custom_call.1} parent=0
    _
  %s6 = ssub.s32 1, %s4
  %s7 = scalar_select 0, %s6, %s4
  $region1: #{tpu_custom_call.1} parent=0
    #allocation3 [shape = 'u8[1024]{0}', space=vmem, size = 0x400, scoped, tag = 'input window, operand 0']
    #allocation4 [shape = 's32[2]{0}', space=sflag, size = 0x8, scoped, tag = 'scoped memory for tpu_custom_call.1']
    #allocation5 [shape = 's32[2]{0}', space=sflag, size = 0x8, scoped, tag = 'scoped memory for tpu_custom_call.1']
    #allocation6 [shape = 'u8[1024]{0}', space=vmem, size = 0x400, scoped, tag = 'input window, operand 1']
    #allocation7 [shape = 's32[2]{0}', space=sflag, size = 0x8, scoped, tag = 'scoped memory for tpu_custom_call.1']
    #allocation8 [shape = 'u8[8192]{0}', space=vmem, size = 0x2000, scoped, tag = 'input window, operand 2']
    #allocation9 [shape = 'u8[1024]{0}', space=vmem, size = 0x400, scoped, tag = 'output window, operand 0']
    %8 = vsyncpa [#allocation4], 0
    %s9 = scalar_lea.sflag [#allocation4], 1
    %10 = vsyncpa %s9, 0
    %11 = vsyncpa [#allocation7], 0
    %s12 = scalar_lea.sflag [#allocation7], 1
    %13 = vsyncpa %s12, 0
    %14 = vsyncpa [#allocation5], 0
    %s15 = scalar_lea.sflag [#allocation5], 1
    %16 = vsyncpa %s15, 0
    loop: start=0, step=1, limit=10
    $region2: #{tpu_custom_call.1} parent=1 // loop_pre_header
      _
    $region3: #{tpu_custom_call.1} parent=1 // loop_header
      %s18 = sphi 0, %s22
      %p19 = scmp.ge.s32.totalorder %s18, 10
      %s25 = sphi 0, %s37
      %s26 = sphi 0, %s33
      %s27 = sphi 0, %s25
      %s28 = sphi 0, %s26
      %s29 = sphi 0, %s27
      %s30 = sphi 0, %s28
      %s40 = sphi 0, %s42
      %s43 = sphi 0, %s40
      %s44 = sphi 0, %s43
      %s60 = sphi 0, %s44
      %s66 = sphi 0, %s68
      %s69 = sphi 0, %s66
      %s70 = sphi 0, %s69
      %s86 = sphi 0, %s70
      %s94 = sphi 0, %s96
      %s97 = sphi 0, %s94
      %s98 = sphi 0, %s97
      %s114 = sphi 0, %s98
      %s120 = sphi 0, %s122
      %s123 = sphi 0, %s120
      %s124 = sphi 0, %s123
      %s140 = sphi 0, %s124
    $region4: #{tpu_custom_call.1} parent=1 // loop_header_branch
      %21 = sbr.rel (%p19) target = $region8
    $region5: #{tpu_custom_call.1} parent=1 // loop_body
      %s23 = ssub.s32 %s18, 1
      %s24 = ssub.s32 %s18, 2
      %s31 = sadd.s32 1, %s26
      %p32 = scmp.ge.s32.totalorder %s31, 4
      %s33 = scalar_select %p32, 0, %s31
      %s34 = sadd.s32 1, %s25
      %s35 = scalar_select %p32, %s34, %s25
      %p36 = scmp.ge.s32.totalorder %s35, 2
      %s37 = scalar_select %p36, 0, %s35
      %s38 = ssub.s32 %s25, %s37
      %p39 = scmp.eq.s32.totalorder %s38, 0
      %s41 = sadd.s32 %s40, 1
      %s42 = scalar_select %p39, %s40, %s41
      %p45 = pneg %p39
      %p46 = scmp.eq.s32.totalorder %s18, 7
      %p47 = por %p45, %p46
      %p48 = scmp.ne.s32.totalorder %s40, %s43
      %p49 = scmp.eq.s32.totalorder %s18, 0
      %p50 = por %p48, %p49
      %p51 = scmp.ne.s32.totalorder %s40, %s43
      %p52 = scmp.eq.s32.totalorder %s23, 7
      %p53 = por %p51, %p52
      %p54 = scmp.ne.s32.totalorder %s43, %s44
      %p55 = scmp.eq.s32.totalorder %s23, 0
      %p56 = por %p54, %p55
      %p57 = scmp.ne.s32.totalorder %s43, %s44
      %p58 = scmp.eq.s32.totalorder %s24, 7
      %p59 = por %p57, %p58
      %p61 = scmp.ne.s32.totalorder %s44, %s60
      %p62 = scmp.eq.s32.totalorder %s24, 0
      %p63 = por %p61, %p62
      %s64 = ssub.s32 %s25, %s37
      %p65 = scmp.eq.s32.totalorder %s64, 0
      %s67 = sadd.s32 %s66, 1
      %s68 = scalar_select %p65, %s66, %s67
      %p71 = pneg %p65
      %p72 = scmp.eq.s32.totalorder %s18, 7
      %p73 = por %p71, %p72
      %p74 = scmp.ne.s32.totalorder %s66, %s69
      %p75 = scmp.eq.s32.totalorder %s18, 0
      %p76 = por %p74, %p75
      %p77 = scmp.ne.s32.totalorder %s66, %s69
      %p78 = scmp.eq.s32.totalorder %s23, 7
      %p79 = por %p77, %p78
      %p80 = scmp.ne.s32.totalorder %s69, %s70
      %p81 = scmp.eq.s32.totalorder %s23, 0
      %p82 = por %p80, %p81
      %p83 = scmp.ne.s32.totalorder %s69, %s70
      %p84 = scmp.eq.s32.totalorder %s24, 7
      %p85 = por %p83, %p84
      %p87 = scmp.ne.s32.totalorder %s70, %s86
      %p88 = scmp.eq.s32.totalorder %s24, 0
      %p89 = por %p87, %p88
      %s90 = ssub.s32 %s26, %s33
      %s91 = ssub.s32 %s25, %s37
      %s92 = sor.u32 %s90, %s91
      %p93 = scmp.eq.s32.totalorder %s92, 0
      %s95 = sadd.s32 %s94, 1
      %s96 = scalar_select %p93, %s94, %s95
      %p99 = pneg %p93
      %p100 = scmp.eq.s32.totalorder %s18, 7
      %p101 = por %p99, %p100
      %p102 = scmp.ne.s32.totalorder %s94, %s97
      %p103 = scmp.eq.s32.totalorder %s18, 0
      %p104 = por %p102, %p103
      %p105 = scmp.ne.s32.totalorder %s94, %s97
      %p106 = scmp.eq.s32.totalorder %s23, 7
      %p107 = por %p105, %p106
      %p108 = scmp.ne.s32.totalorder %s97, %s98
      %p109 = scmp.eq.s32.totalorder %s23, 0
      %p110 = por %p108, %p109
      %p111 = scmp.ne.s32.totalorder %s97, %s98
      %p112 = scmp.eq.s32.totalorder %s24, 7
      %p113 = por %p111, %p112
      %p115 = scmp.ne.s32.totalorder %s98, %s114
      %p116 = scmp.eq.s32.totalorder %s24, 0
      %p117 = por %p115, %p116
      %s118 = ssub.s32 %s25, %s37
      %p119 = scmp.eq.s32.totalorder %s118, 0
      %s121 = sadd.s32 %s120, 1
      %s122 = scalar_select %p119, %s120, %s121
      %p125 = pneg %p119
      %p126 = scmp.eq.s32.totalorder %s18, 7
      %p127 = por %p125, %p126
      %p128 = scmp.ne.s32.totalorder %s120, %s123
      %p129 = scmp.eq.s32.totalorder %s18, 0
      %p130 = por %p128, %p129
      %p131 = scmp.ne.s32.totalorder %s120, %s123
      %p132 = scmp.eq.s32.totalorder %s23, 7
      %p133 = por %p131, %p132
      %p134 = scmp.ne.s32.totalorder %s123, %s124
      %p135 = scmp.eq.s32.totalorder %s23, 0
      %p136 = por %p134, %p135
      %p137 = scmp.ne.s32.totalorder %s123, %s124
      %p138 = scmp.eq.s32.totalorder %s24, 7
      %p139 = por %p137, %p138
      %p141 = scmp.ne.s32.totalorder %s124, %s140
      %p142 = scmp.eq.s32.totalorder %s24, 0
      %p143 = por %p141, %p142
      %p144 = scmp.le.s32.totalorder 1, %s18
      %p145 = scmp.lt.s32.totalorder %s18, 9
      %p146 = pnand %p144, %p145
      %p147 = pneg %p146
      // Predicated region
      $region9: #{tpu_custom_call.1} parent=5 // pred_check
        _
      $region10: #{tpu_custom_call.1} parent=5 // pred_check_branch
        %149 = sbr.rel (%p146) target = $region12
      $region11: #{tpu_custom_call.1} parent=5 // pred_region
        %s150 = ssub.s32 %s18, 1
      $region12: #{tpu_custom_call.1} parent=5 // pred_fallthru
        _
      %p151 = scmp.lt.s32.totalorder %s18, 8
      // Predicated region
      $region13: #{tpu_custom_call.1} parent=5 // pred_check
        %p152 = pneg %p151
      $region14: #{tpu_custom_call.1} parent=5 // pred_check_branch
        %154 = sbr.rel (%p152) target = $region16
      $region15: #{tpu_custom_call.1} parent=5 // pred_region
        // Predicated region
        $region17: #{tpu_custom_call.1} parent=15 // pred_check
          %p155 = pneg %p50
        $region18: #{tpu_custom_call.1} parent=15 // pred_check_branch
          %157 = sbr.rel (%p155) target = $region20
        $region19: #{tpu_custom_call.1} parent=15 // pred_region
          %s158 = sand.u32 %s40, 1
          %s159 = scalar_lea.sflag [#allocation4], %s158
          %s160 = sand.u32 %s40, 1
          %s161 = scalar_lea.vmem [#allocation3], %s160
          %s163 = ssub.s32 16, 16
          %164 = vsyncadd %s159, %s163
          %s165 = smul.addr %s25, 16
          %s166 = scalar_lea.hbm %s0, %s165
          %s168 = sshll.u32 %s161, 4
          %s169 = int_to_ptr.vmem [resolvable:$true] %s168
          %171 = dma.hbm_to_vmem [thread:$0]  %s166, 16, %s169, %s159
        $region20: #{tpu_custom_call.1} parent=15 // pred_fallthru
          _
        // Predicated region
        $region21: #{tpu_custom_call.1} parent=15 // pred_check
          %p172 = pneg %p76
        $region22: #{tpu_custom_call.1} parent=15 // pred_check_branch
          %174 = sbr.rel (%p172) target = $region24
        $region23: #{tpu_custom_call.1} parent=15 // pred_region
          %s175 = sand.u32 %s18, 1
          %s176 = scalar_lea.sflag [#allocation7], %s175
          %s177 = sand.u32 %s66, 1
          %s178 = scalar_lea.vmem [#allocation6], %s177
          %s180 = ssub.s32 16, 16
          %181 = vsyncadd %s176, %s180
          %s182 = smul.addr %s25, 16
          %s183 = scalar_lea.hbm %s1, %s182
          %s185 = sshll.u32 %s178, 4
          %s186 = int_to_ptr.vmem [resolvable:$true] %s185
          %188 = dma.hbm_to_vmem [thread:$0]  %s183, 16, %s186, %s176
        $region24: #{tpu_custom_call.1} parent=15 // pred_fallthru
          _
        // Predicated region
        $region25: #{tpu_custom_call.1} parent=15 // pred_check
          %p189 = pneg %p104
        $region26: #{tpu_custom_call.1} parent=15 // pred_check_branch
          %191 = sbr.rel (%p189) target = $region28
        $region27: #{tpu_custom_call.1} parent=15 // pred_region
          %s192 = sand.u32 %s18, 1
          %s193 = scalar_lea.sflag [#allocation7], %s192
          %s194 = sand.u32 %s94, 1
          %s195 = smul.addr %s194, 8
          %s196 = scalar_lea.vmem [#allocation8], %s195
          %s198 = ssub.s32 128, 128
          %199 = vsyncadd %s193, %s198
          %s200 = smul.addr %s26, 2
          %s201 = sadd.s32 %s25, %s200
          %s202 = smul.addr %s201, 128
          %s203 = scalar_lea.hbm %s2, %s202
          %s205 = sshll.u32 %s196, 4
          %s206 = int_to_ptr.vmem [resolvable:$true] %s205
          %208 = dma.hbm_to_vmem [thread:$0]  %s203, 128, %s206, %s193
        $region28: #{tpu_custom_call.1} parent=15 // pred_fallthru
          _
      $region16: #{tpu_custom_call.1} parent=5 // pred_fallthru
        _
      %p209 = scmp.le.s32.totalorder 1, %s18
      %p210 = scmp.lt.s32.totalorder %s18, 9
      %p211 = pnand %p209, %p210
      %p212 = pneg %p211
      // Predicated region
      $region29: #{tpu_custom_call.1} parent=5 // pred_check
        _
      $region30: #{tpu_custom_call.1} parent=5 // pred_check_branch
        %214 = sbr.rel (%p211) target = $region32
      $region31: #{tpu_custom_call.1} parent=5 // pred_region
        %s215 = ssub.s32 %s18, 1
        %s216 = sand.u32 %s43, 1
        %s217 = scalar_lea.sflag [#allocation4], %s216
        %s218 = sand.u32 %s43, 1
        %s219 = scalar_lea.vmem [#allocation3], %s218
        // Predicated region
        $region33: #{tpu_custom_call.1} parent=31 // pred_check
          %p220 = pneg %p56
        $region34: #{tpu_custom_call.1} parent=31 // pred_check_branch
          %222 = sbr.rel (%p220) target = $region36
        $region35: #{tpu_custom_call.1} parent=31 // pred_region
          %223 = dma.done %s217, 16
        $region36: #{tpu_custom_call.1} parent=31 // pred_fallthru
          _
        %s224 = sand.u32 %s23, 1
        %s225 = scalar_lea.sflag [#allocation7], %s224
        %s226 = sand.u32 %s69, 1
        %s227 = scalar_lea.vmem [#allocation6], %s226
        // Predicated region
        $region37: #{tpu_custom_call.1} parent=31 // pred_check
          %p228 = pneg %p82
        $region38: #{tpu_custom_call.1} parent=31 // pred_check_branch
          %230 = sbr.rel (%p228) target = $region40
        $region39: #{tpu_custom_call.1} parent=31 // pred_region
          %231 = dma.done %s225, 16
        $region40: #{tpu_custom_call.1} parent=31 // pred_fallthru
          _
        %s232 = sand.u32 %s23, 1
        %s233 = scalar_lea.sflag [#allocation7], %s232
        %s234 = sand.u32 %s97, 1
        %s235 = smul.addr %s234, 8
        %s236 = scalar_lea.vmem [#allocation8], %s235
        // Predicated region
        $region41: #{tpu_custom_call.1} parent=31 // pred_check
          %p237 = pneg %p110
        $region42: #{tpu_custom_call.1} parent=31 // pred_check_branch
          %239 = sbr.rel (%p237) target = $region44
        $region43: #{tpu_custom_call.1} parent=31 // pred_region
          %240 = dma.done %s233, 128
        $region44: #{tpu_custom_call.1} parent=31 // pred_fallthru
          _
        %s241 = sand.u32 %s43, 1
        %s242 = scalar_lea.sflag [#allocation4], %s241
        %s243 = sand.u32 %s43, 1
        %s244 = scalar_lea.vmem [#allocation3], %s243
        %p245 = pneg %p56
        %p246 = pneg %p53
        %s247 = sand.u32 %s23, 1
        %s248 = scalar_lea.sflag [#allocation7], %s247
        %s249 = sand.u32 %s69, 1
        %s250 = scalar_lea.vmem [#allocation6], %s249
        %p251 = pneg %p82
        %p252 = pneg %p79
        %s253 = sand.u32 %s23, 1
        %s254 = scalar_lea.sflag [#allocation7], %s253
        %s255 = sand.u32 %s97, 1
        %s256 = smul.addr %s255, 8
        %s257 = scalar_lea.vmem [#allocation8], %s256
        %p258 = pneg %p110
        %p259 = pneg %p107
        %p260 = pneg %p136
        %p261 = pneg %p133
        %s262 = sand.u32 %s123, 1
        %s263 = scalar_lea.sflag [#allocation5], %s262
        %s264 = sand.u32 %s123, 1
        %s265 = scalar_lea.vmem [#allocation9], %s264
        %p266 = scmp.eq.s32.totalorder %s28, 0
        // Predicated region
        $region45: #{tpu_custom_call.1} parent=31 // pred_check
          %p267 = pneg %p266
        $region46: #{tpu_custom_call.1} parent=31 // pred_check_branch
          %269 = sbr.rel (%p267) target = $region48
        $region47: #{tpu_custom_call.1} parent=31 // pred_region
          %270 = vst [vmem:[#allocation2] sm:$0x1] -inf
        $region48: #{tpu_custom_call.1} parent=31 // pred_fallthru
          _
        %v271 = vld [vmem:[#allocation2] sm:$0x1]
        %v272 = vld [vmem:[%s236] sm:$0xff]
        %v273 = vrot.slane %v272, 4
        %v274 = vmax.f32 %v272, %v273
        %v275 = vrot.slane %v274, 2
        %v276 = vmax.f32 %v274, %v275
        %v277 = vrot.slane %v276, 1
        %v278 = vmax.f32 %v276, %v277
        %v279 = vmax.f32 %v271, %v278
        %280 = vst [vmem:[#allocation2] sm:$0x1] %v279
        %p281 = scmp.eq.s32.totalorder %s28, 3
        // Predicated region
        $region49: #{tpu_custom_call.1} parent=31 // pred_check
          %p282 = pneg %p281
        $region50: #{tpu_custom_call.1} parent=31 // pred_check_branch
          %284 = sbr.rel (%p282) target = $region52
        $region51: #{tpu_custom_call.1} parent=31 // pred_region
          %v285 = vld [vmem:[%s227] sm:$0x1]
          %v286 = vld [vmem:[%s219] sm:$0x1]
          %v287 = vand.u32 2147483647, %v286
          %v288 = vsub.f32 0.0, %v287
          %v289 = vmul.f32 %v288, 1.442695
          %v290 = vpow.pop %v289
          %v291 = vmax.f32 %v286, 0.0
          %v292 = vmul.f32 %v286, %v285
          %v293 = vsub.f32 %v291, %v292
          %v294 = vadd.f32 %v290, 1.0
          %v295 = vlog2.pop %v294
          %v296 = vmul.f32 %v295, 0.6931472
          %v297 = vmul.f32 -0.5, %v290
          %v298 = vadd.f32 %v297, 1.0
          %v299 = vmul.f32 %v298, %v290
          %v300 = vand.u32 2147483647, %v290
          %vm301 = vcmp.lt.f32.partialorder %v300, 0.0004427343
          %v302 = vsel %vm301, %v299, %v296
          %v303 = vadd.f32 %v293, %v302
          %v304 = vadd.f32 %v290, 1.0
          %v305 = vrcp.pop %v304
          %v306 = vmul.f32 1.0, %v305
          %vm307 = vcmp.ge.f32.partialorder %v286, 0.0
          %v308 = vmul.f32 %v290, %v306
          %v309 = vsel %vm307, %v306, %v308
          %v310 = vmax.f32 %v309, 0.0001
          %v311 = vmin.f32 %v310, 0.9999
          %v312 = vsub.f32 1.0, %v311
          %v313 = vmul.f32 %v285, 0.25
          %v314 = vmul.f32 %v312, %v312
          %v315 = vmul.f32 %v313, %v314
          %v316 = vmul.f32 %v315, %v303
          %v317 = vsub.f32 1.0, %v285
          %v318 = vmul.f32 %v311, %v311
          %v319 = vmul.f32 %v317, %v318
          %v320 = vmul.f32 %v319, %v303
          %v321 = vadd.f32 %v316, %v320
          %vm322 = vcmask 1040384
          %v323 = vsel %vm322, %v321, 0.0
          %324 = vadd.xlane.f32.xlu0 %v323
          %v325 = vpop.xlane.xlu0 %324
          %v326 = vrot.slane %v325, 4
          %v327 = vadd.f32 %v325, %v326
          %v328 = vrot.slane %v327, 2
          %v329 = vadd.f32 %v327, %v328
          %v330 = vrot.slane %v329, 1
          %v331 = vadd.f32 %v329, %v330
          %s332 = vtos %v331
          %v333 = vld [vmem:[#allocation2] sm:$0x1]
          %v334 = vand.u32 2147483647, %v333
          %v335 = vsub.f32 0.0, %v334
          %v336 = vmul.f32 %v335, 1.442695
          %v337 = vpow.pop %v336
          %v338 = vmax.f32 %v333, 0.0
          %v339 = vmul.f32 %v333, %v285
          %v340 = vsub.f32 %v338, %v339
          %v341 = vadd.f32 %v337, 1.0
          %v342 = vlog2.pop %v341
          %v343 = vmul.f32 %v342, 0.6931472
          %v344 = vmul.f32 -0.5, %v337
          %v345 = vadd.f32 %v344, 1.0
          %v346 = vmul.f32 %v345, %v337
          %v347 = vand.u32 2147483647, %v337
          %vm348 = vcmp.lt.f32.partialorder %v347, 0.0004427343
          %v349 = vsel %vm348, %v346, %v343
          %v350 = vadd.f32 %v340, %v349
          %v351 = vadd.f32 %v337, 1.0
          %v352 = vrcp.pop %v351
          %v353 = vmul.f32 1.0, %v352
          %vm354 = vcmp.ge.f32.partialorder %v333, 0.0
          %v355 = vmul.f32 %v337, %v353
          %v356 = vsel %vm354, %v353, %v355
          %v357 = vmax.f32 %v356, 0.0001
          %v358 = vmin.f32 %v357, 0.9999
          %v359 = vsub.f32 1.0, %v358
          %v360 = vmul.f32 %v359, %v359
          %v361 = vmul.f32 %v313, %v360
          %v362 = vmul.f32 %v361, %v350
          %v363 = vmul.f32 %v358, %v358
          %v364 = vmul.f32 %v317, %v363
          %v365 = vmul.f32 %v364, %v350
          %v366 = vadd.f32 %v362, %v365
          %v367 = vsel %vm322, %v366, 0.0
          %368 = vadd.xlane.f32.xlu0 %v367
          %v369 = vpop.xlane.xlu0 %368
          %v370 = vrot.slane %v369, 4
          %v371 = vadd.f32 %v369, %v370
          %v372 = vrot.slane %v371, 2
          %v373 = vadd.f32 %v371, %v372
          %v374 = vrot.slane %v373, 1
          %v375 = vadd.f32 %v373, %v374
          %s376 = vtos %v375
          %s377 = sadd.f32 %s332, %s376
          %v378 = vstv %s377
          %379 = vst [vmem:[%s265] sm:$0x1] %v378
        $region52: #{tpu_custom_call.1} parent=31 // pred_fallthru
          _
        %s380 = sand.u32 %s123, 1
        %s381 = scalar_lea.sflag [#allocation5], %s380
        %s382 = sand.u32 %s123, 1
        %s383 = scalar_lea.vmem [#allocation9], %s382
        // Predicated region
        $region53: #{tpu_custom_call.1} parent=31 // pred_check
          %p384 = pneg %p133
        $region54: #{tpu_custom_call.1} parent=31 // pred_check_branch
          %386 = sbr.rel (%p384) target = $region56
        $region55: #{tpu_custom_call.1} parent=31 // pred_region
          %s388 = ssub.s32 16, 16
          %389 = vsyncadd %s381, %s388
          %s390 = smul.addr %s27, 16
          %s391 = scalar_lea.hbm %s3, %s390
          %s393 = sshll.u32 %s383, 4
          %s394 = int_to_ptr.vmem [resolvable:$true] %s393
          %396 = dma.vmem_to_hbm [thread:$0]  %s394, 16, %s391, %s381
        $region56: #{tpu_custom_call.1} parent=31 // pred_fallthru
          _
      $region32: #{tpu_custom_call.1} parent=5 // pred_fallthru
        _
      %p397 = scmp.le.s32.totalorder 2, %s18
      // Predicated region
      $region57: #{tpu_custom_call.1} parent=5 // pred_check
        %p398 = pneg %p397
      $region58: #{tpu_custom_call.1} parent=5 // pred_check_branch
        %400 = sbr.rel (%p398) target = $region60
      $region59: #{tpu_custom_call.1} parent=5 // pred_region
        %s401 = ssub.s32 %s18, 2
        // Predicated region
        $region61: #{tpu_custom_call.1} parent=59 // pred_check
          %p402 = pneg %p139
        $region62: #{tpu_custom_call.1} parent=59 // pred_check_branch
          %404 = sbr.rel (%p402) target = $region64
        $region63: #{tpu_custom_call.1} parent=59 // pred_region
          %s405 = sand.u32 %s124, 1
          %s406 = scalar_lea.sflag [#allocation5], %s405
          %s407 = sand.u32 %s124, 1
          %s408 = scalar_lea.vmem [#allocation9], %s407
          %409 = dma.done %s406, 16
        $region64: #{tpu_custom_call.1} parent=59 // pred_fallthru
          _
      $region60: #{tpu_custom_call.1} parent=5 // pred_fallthru
        _
    $region6: #{tpu_custom_call.1} parent=1 // loop_footer
      %s22 = sadd.s32 1, %s18
    $region7: #{tpu_custom_call.1} parent=1 // loop_footer_branch
      %17 = sbr.rel target = $region3
    $region8: #{tpu_custom_call.1} parent=1 // loop_exit
      _
    %410 = vsyncpa [#allocation4], 1
    %s411 = scalar_lea.sflag [#allocation4], 1
    %412 = vsyncpa %s411, 1
    %413 = vsyncpa [#allocation7], 1
    %s414 = scalar_lea.sflag [#allocation7], 1
    %415 = vsyncpa %s414, 1
    %416 = vsyncpa [#allocation5], 1
    %s417 = scalar_lea.sflag [#allocation5], 1
    %418 = vsyncpa %s417, 1

</llo_original>
